<compile_context>
chip_gen: v6e
topology: v6e:2x2x1
jax: 0.10.0
libtpu: 0.0.40
codegen_flags: <defaults>
</compile_context>

<pallas_src>
import functools

import jax
import jax.numpy as jnp
from jax.experimental import pallas as pl
from jax.experimental.pallas import tpu as pltpu


def _add_pos_kernel(x_ref, pe_ref, o_ref):
    # x_ref / pe_ref / o_ref: (1, t_rows, 128) VMEM tiles. Pure VPU add.
    o_ref[...] = x_ref[...] + pe_ref[...]


def _ceil_div(a, b):
    return -(-a // b)


def _vmem_capacity_bytes():
    """Physical VMEM per TensorCore; conservative (v7x: 64 MiB) fallback."""
    try:
        cap = int(pltpu.get_tpu_info().vmem_capacity_bytes)
        if cap > 0:
            return cap
    except Exception:
        pass
    return 64 << 20


def _pick_row_tile(num_rows, itemsize, block_cap_bytes, batch):
    """Row-tile for the flattened (B, R, 128) view.

    - multiple of the dtype's sublane minimum (8/16/32), or the full extent,
    - at most block_cap_bytes per block (~4 MiB),
    - enough r-tiles that v7x's two TensorCores each get >= ~4 pipelined steps
      (r is the megacore-split axis), without shrinking below ~cap/8 per block
      (per-grid-step overhead ~0.35 us would start to dominate).
    """
    min_sub = {4: 8, 2: 16, 1: 32}.get(itemsize, 8)
    if num_rows <= min_sub:
        return num_rows  # full-extent block: always legal, even < 8 sublanes
    cap_rows = max(min_sub, (block_cap_bytes // (128 * itemsize)) // min_sub * min_sub)
    t = min(cap_rows, (num_rows // min_sub) * min_sub)
    min_r_blocks = max(2, _ceil_div(8, batch))  # >= ~4 steps per TC at small B
    if _ceil_div(num_rows, t) < min_r_blocks:
        want = _ceil_div(_ceil_div(num_rows, min_r_blocks), min_sub) * min_sub
        floor_rows = max(min_sub, cap_rows // 8)  # never shrink below ~cap/8
        t = min(t, max(want, floor_rows))
    return max(t, min_sub)


def _pallas_add(x_r, pe_r, t_rows, itemsize):
    B, R, L = x_r.shape
    r_blocks = pl.cdiv(R, t_rows)  # partial last block handled via masked stores
    block_bytes = t_rows * L * itemsize
    # 3 arrays (x, pe, out) x default double-buffering + ~4 MiB headroom,
    # floored at the 16 MiB v5e default and capped at 32 MiB (safe on v7x's
    # 64 MiB physical VMEM).
    vmem_limit = int(min(max(6 * block_bytes + (4 << 20), 16 << 20), 32 << 20))
    cost = pl.CostEstimate(
        flops=B * R * L,
        transcendentals=0,
        bytes_accessed=(2 * B + 1) * R * L * itemsize,
    )
    return pl.pallas_call(
        _add_pos_kernel,
        out_shape=jax.ShapeDtypeStruct((B, R, L), x_r.dtype),
        grid_spec=pltpu.PrefetchScalarGridSpec(
            num_scalar_prefetch=0,
            # r outer ("parallel": the axis megacore / v7x's 2 TCs split),
            # b inner ("arbitrary": guarantees b varies fastest so pe's block
            # index is constant across consecutive steps -> pe refetch skipped).
            grid=(r_blocks, B),
            in_specs=[
                pl.BlockSpec((1, t_rows, L), lambda r, b: (b, r, 0)),   # x
                pl.BlockSpec((1, t_rows, L), lambda r, b: (0, r, 0)),   # pe
            ],
            out_specs=pl.BlockSpec((1, t_rows, L), lambda r, b: (b, r, 0)),
        ),
        compiler_params=pltpu.CompilerParams(
            dimension_semantics=("parallel", "arbitrary"),
            vmem_limit_bytes=vmem_limit,
        ),
        cost_estimate=cost,
        # Output reuses x's HBM buffer (pure elementwise map, block-local).
        input_output_aliases={0: 0},
    )(x_r, pe_r)


@functools.partial(
    jax.jit,
    donate_argnums=(0,),                      # realize the in-place alias on x
    static_argnames=("min_pallas_elements",),
)
def learned_positional_encoding(x, position_embeddings, *, min_pallas_elements=1 << 16):
    """x: (B, S, D); position_embeddings: (1, S, D). Returns x + pe.

    NOTE: x is donated -- do not reuse the input array after calling.
    """
    B, S, D = x.shape
    assert position_embeddings.shape == (1, S, D)
    assert position_embeddings.dtype == x.dtype

    sd = S * D
    if x.size < min_pallas_elements or sd % 128 != 0:
        # tiny or non-lane-dense shapes: XLA's fused add is strictly faster
        return x + position_embeddings

    itemsize = jnp.dtype(x.dtype).itemsize
    # Generation-aware budget: <= 3/8 of physical VMEM (<= 48 MiB) live across
    # the 3 double-buffered arrays -> ~4 MiB blocks on v5e/v6e/v7x.
    vmem_cap = _vmem_capacity_bytes()
    live_budget = min(48 << 20, (vmem_cap * 3) // 8)
    block_cap = max(128 << 10, min(4 << 20, live_budget // 6))

    R = sd // 128
    t_rows = _pick_row_tile(R, itemsize, block_cap, B)

    x_r = x.reshape(B, R, 128)                      # lane-dense 128-wide view
    pe_r = position_embeddings.reshape(1, R, 128)
    out_r = _pallas_add(x_r, pe_r, t_rows, itemsize)
    return out_r.reshape(B, S, D)


if __name__ == "__main__":
    key = jax.random.PRNGKey(0)

    def run_case(B, S, D, dtype=jnp.float32):
        kx, kp = jax.random.split(jax.random.fold_in(key, S * 131 + D))
        x = jax.random.normal(kx, (B, S, D), dtype=dtype)
        # nn.Parameter(torch.zeros(...)) is zero-init; use a non-zero table so
        # the broadcast-add is actually exercised.
        pe = (0.01 * jax.random.normal(kp, (1, S, D))).astype(dtype)
        # Reference BEFORE the kernel call: x is donated by the wrapper.
        ref = jax.block_until_ready(x + pe)
        out = learned_positional_encoding(x, pe, min_pallas_elements=0)
        out = jax.block_until_ready(out)
        assert out.shape == (B, S, D) and out.dtype == dtype
        assert jnp.allclose(out, ref, atol=1e-5), f"mismatch at {(B, S, D)}"

    # Module-sized demo (batch=2, position_size=8, embedding_dim=32); forces
    # the Pallas path (min_pallas_elements=0) with a full-extent row block.
    run_case(2, 8, 32)
    # Tiled path with a partial (masked-store) last row-block: R = 24*64/128 = 12.
    run_case(2, 24, 64)
    # Non-lane-dense shape (S*D % 128 != 0) -> XLA fused-add fallback path.
    run_case(2, 8, 30)

    print("KERNEL_OK")
</pallas_src>

<mosaic_0001>
module attributes {stable_mosaic.version = 11 : i64} {
  func.func @_add_pos_kernel(%arg0: i32, %arg1: i32, %arg2: memref<1x2x128xf32, #tpu.memory_space<vmem>>, %arg3: memref<1x2x128xf32, #tpu.memory_space<vmem>>, %arg4: memref<1x2x128xf32, #tpu.memory_space<vmem>>) attributes {dimension_semantics = [#tpu.dimension_semantics<parallel>, #tpu.dimension_semantics<arbitrary>], iteration_bounds = array<i64: 1, 2>, scalar_prefetch = 0 : i64, scratch_operands = 0 : i64, tpu.core_type = #tpu.core_type<tc>, window_params = [{transform_indices = @transform_0, window_bounds = array<i64: 1, 2, 128>}, {transform_indices = @transform_1, window_bounds = array<i64: 1, 2, 128>}, {transform_indices = @transform_2, window_bounds = array<i64: 1, 2, 128>}]} {
    %c0 = arith.constant 0 : index
    %c0_0 = arith.constant 0 : index
    %c0_1 = arith.constant 0 : index
    %0 = vector.load %arg2[%c0, %c0_0, %c0_1] : memref<1x2x128xf32, #tpu.memory_space<vmem>>, vector<1x2x128xf32>
    %c0_2 = arith.constant 0 : index
    %c0_3 = arith.constant 0 : index
    %c0_4 = arith.constant 0 : index
    %1 = vector.load %arg3[%c0_2, %c0_3, %c0_4] : memref<1x2x128xf32, #tpu.memory_space<vmem>>, vector<1x2x128xf32>
    %2 = arith.addf %0, %1 : vector<1x2x128xf32>
    %c0_5 = arith.constant 0 : index
    %c0_6 = arith.constant 0 : index
    %c0_7 = arith.constant 0 : index
    %3 = vector.load %arg4[%c0_5, %c0_6, %c0_7] : memref<1x2x128xf32, #tpu.memory_space<vmem>>, vector<1x2x128xf32>
    tpu.vector_store %arg4[%c0_5, %c0_6, %c0_7], %2 {strides = array<i32>} : memref<1x2x128xf32, #tpu.memory_space<vmem>>, vector<1x2x128xf32>,
    return
  }
  func.func @transform_0(%arg0: i32, %arg1: i32) -> (i32, i32, i32) {
    %c0_i32 = arith.constant 0 : i32
    %c0_i32_0 = arith.constant 0 : i32
    return %arg1, %arg0, %c0_i32 : i32, i32, i32
  }
  func.func @transform_1(%arg0: i32, %arg1: i32) -> (i32, i32, i32) {
    %c0_i32 = arith.constant 0 : i32
    %c0_i32_0 = arith.constant 0 : i32
    %c0_i32_1 = arith.constant 0 : i32
    return %c0_i32, %arg0, %c0_i32_0 : i32, i32, i32
  }
  func.func @transform_2(%arg0: i32, %arg1: i32) -> (i32, i32, i32) {
    %c0_i32 = arith.constant 0 : i32
    %c0_i32_0 = arith.constant 0 : i32
    return %arg1, %arg0, %c0_i32 : i32, i32, i32
  }
}

</mosaic_0001>

<llo_original>
// kernel: learned_positional_encoding.1
$region0: #{learned_positional_encoding.1}
  #allocation0 [shape = 'u32[]', space=smem, size = 0x4, offset = 0x4, fixed_abs, tag = 'smem constant byte address 0x4 - core index']
  #allocation1 [shape = 'u32[144,128]{1,0:T(1,128)}', space=vmem, size = 0x12000, scoped, tag = 'internal scratch']
  %s0 = inlined_call_operand.vmem [shape: f32[2,2,128], index: 0, kind: input, shape index: {}, may-alias: {0,2}]
  %s1 = inlined_call_operand.vmem [shape: f32[1,2,128], index: 1, kind: input, shape index: {}]
  %s2 = inlined_call_operand.vmem [shape: f32[2,2,128], index: 2, kind: output, shape index: {}, may-alias: {0,2}]
  %s3 = sld [smem:[#allocation0]]
  $region41: #{learned_positional_encoding.1} parent=0
    _
  %s5 = ssub.s32 1, %s3
  %s6 = scalar_select 0, %s5, %s3
  loop: start=0, step=1, limit=4
  $region2: #{learned_positional_encoding.1} parent=0 // loop_pre_header
    _
  $region3: #{learned_positional_encoding.1} parent=0 // loop_header
    %s8 = sphi 0, %s12
    %p9 = scmp.ge.s32.totalorder %s8, 4
    %s15 = sphi 0, %s27
    %s16 = sphi 0, %s23
    %s17 = sphi 0, %s15
    %s18 = sphi 0, %s16
    %s19 = sphi 0, %s17
    %s20 = sphi 0, %s18
    %s32 = sphi 0, %s34
    %s35 = sphi 0, %s32
    %s36 = sphi 0, %s35
    %s52 = sphi 0, %s36
    %s58 = sphi 0, %s60
    %s61 = sphi 0, %s58
    %s62 = sphi 0, %s61
    %s78 = sphi 0, %s62
    %s86 = sphi 0, %s88
    %s89 = sphi 0, %s86
    %s90 = sphi 0, %s89
    %s106 = sphi 0, %s90
  $region4: #{learned_positional_encoding.1} parent=0 // loop_header_branch
    %11 = sbr.rel (%p9) target = $region8
  $region5: #{learned_positional_encoding.1} parent=0 // loop_body
    %s13 = ssub.s32 %s8, 1
    %s14 = ssub.s32 %s8, 2
    %s21 = sadd.s32 1, %s16
    %p22 = scmp.ge.s32.totalorder %s21, 2
    %s23 = scalar_select %p22, 0, %s21
    %s24 = sadd.s32 1, %s15
    %s25 = scalar_select %p22, %s24, %s15
    %p26 = scmp.ge.s32.totalorder %s25, 1
    %s27 = scalar_select %p26, 0, %s25
    %s28 = ssub.s32 %s16, %s23
    %s29 = ssub.s32 %s15, %s27
    %s30 = sor.u32 %s28, %s29
    %p31 = scmp.eq.s32.totalorder %s30, 0
    %s33 = sadd.s32 %s32, 1
    %s34 = scalar_select %p31, %s32, %s33
    %p37 = pneg %p31
    %p38 = scmp.eq.s32.totalorder %s8, 1
    %p39 = por %p37, %p38
    %p40 = scmp.ne.s32.totalorder %s32, %s35
    %p41 = scmp.eq.s32.totalorder %s8, 0
    %p42 = por %p40, %p41
    %p43 = scmp.ne.s32.totalorder %s32, %s35
    %p44 = scmp.eq.s32.totalorder %s13, 1
    %p45 = por %p43, %p44
    %p46 = scmp.ne.s32.totalorder %s35, %s36
    %p47 = scmp.eq.s32.totalorder %s13, 0
    %p48 = por %p46, %p47
    %p49 = scmp.ne.s32.totalorder %s35, %s36
    %p50 = scmp.eq.s32.totalorder %s14, 1
    %p51 = por %p49, %p50
    %p53 = scmp.ne.s32.totalorder %s36, %s52
    %p54 = scmp.eq.s32.totalorder %s14, 0
    %p55 = por %p53, %p54
    %s56 = ssub.s32 %s15, %s27
    %p57 = scmp.eq.s32.totalorder %s56, 0
    %s59 = sadd.s32 %s58, 1
    %s60 = scalar_select %p57, %s58, %s59
    %p63 = pneg %p57
    %p64 = scmp.eq.s32.totalorder %s8, 1
    %p65 = por %p63, %p64
    %p66 = scmp.ne.s32.totalorder %s58, %s61
    %p67 = scmp.eq.s32.totalorder %s8, 0
    %p68 = por %p66, %p67
    %p69 = scmp.ne.s32.totalorder %s58, %s61
    %p70 = scmp.eq.s32.totalorder %s13, 1
    %p71 = por %p69, %p70
    %p72 = scmp.ne.s32.totalorder %s61, %s62
    %p73 = scmp.eq.s32.totalorder %s13, 0
    %p74 = por %p72, %p73
    %p75 = scmp.ne.s32.totalorder %s61, %s62
    %p76 = scmp.eq.s32.totalorder %s14, 1
    %p77 = por %p75, %p76
    %p79 = scmp.ne.s32.totalorder %s62, %s78
    %p80 = scmp.eq.s32.totalorder %s14, 0
    %p81 = por %p79, %p80
    %s82 = ssub.s32 %s16, %s23
    %s83 = ssub.s32 %s15, %s27
    %s84 = sor.u32 %s82, %s83
    %p85 = scmp.eq.s32.totalorder %s84, 0
    %s87 = sadd.s32 %s86, 1
    %s88 = scalar_select %p85, %s86, %s87
    %p91 = pneg %p85
    %p92 = scmp.eq.s32.totalorder %s8, 1
    %p93 = por %p91, %p92
    %p94 = scmp.ne.s32.totalorder %s86, %s89
    %p95 = scmp.eq.s32.totalorder %s8, 0
    %p96 = por %p94, %p95
    %p97 = scmp.ne.s32.totalorder %s86, %s89
    %p98 = scmp.eq.s32.totalorder %s13, 1
    %p99 = por %p97, %p98
    %p100 = scmp.ne.s32.totalorder %s89, %s90
    %p101 = scmp.eq.s32.totalorder %s13, 0
    %p102 = por %p100, %p101
    %p103 = scmp.ne.s32.totalorder %s89, %s90
    %p104 = scmp.eq.s32.totalorder %s14, 1
    %p105 = por %p103, %p104
    %p107 = scmp.ne.s32.totalorder %s90, %s106
    %p108 = scmp.eq.s32.totalorder %s14, 0
    %p109 = por %p107, %p108
    %p110 = scmp.le.s32.totalorder 1, %s8
    %p111 = scmp.lt.s32.totalorder %s8, 3
    %p112 = pnand %p110, %p111
    %p113 = pneg %p112
    // Predicated region
    $region9: #{learned_positional_encoding.1} parent=5 // pred_check
      _
    $region10: #{learned_positional_encoding.1} parent=5 // pred_check_branch
      %115 = sbr.rel (%p112) target = $region12
    $region11: #{learned_positional_encoding.1} parent=5 // pred_region
      %s116 = ssub.s32 %s8, 1
      // Predicated region
      $region13: #{learned_positional_encoding.1} parent=11 // pred_check
        %p117 = pneg %p74
      $region14: #{learned_positional_encoding.1} parent=11 // pred_check_branch
        %119 = sbr.rel (%p117) target = $region16
      $region15: #{learned_positional_encoding.1} parent=11 // pred_region
        %p120 = scmp.lt.s32.totalorder %s17, 0
        %s121 = scalar_select %p120, %s17, 0
        %s122 = smul.addr %s121, 2
        %s123 = scalar_lea.vmem %s1, %s122
      $region16: #{learned_positional_encoding.1} parent=11 // pred_fallthru
        _
    $region12: #{learned_positional_encoding.1} parent=5 // pred_fallthru
      _
    %p124 = scmp.lt.s32.totalorder %s8, 2
    // Predicated region
    $region17: #{learned_positional_encoding.1} parent=5 // pred_check
      %p125 = pneg %p124
    $region18: #{learned_positional_encoding.1} parent=5 // pred_check_branch
      %127 = sbr.rel (%p125) target = $region20
    $region19: #{learned_positional_encoding.1} parent=5 // pred_region
      // Predicated region
      $region21: #{learned_positional_encoding.1} parent=19 // pred_check
        %p128 = pneg %p42
      $region22: #{learned_positional_encoding.1} parent=19 // pred_check_branch
        %130 = sbr.rel (%p128) target = $region24
      $region23: #{learned_positional_encoding.1} parent=19 // pred_region
        %p131 = scmp.lt.s32.totalorder %s16, 1
        %s132 = scalar_select %p131, %s16, 1
        %p133 = scmp.lt.s32.totalorder %s15, 0
        %s134 = scalar_select %p133, %s15, 0
        %s135 = sadd.s32 %s134, %s132
        %s136 = smul.addr %s135, 2
        %s137 = scalar_lea.vmem %s0, %s136
      $region24: #{learned_positional_encoding.1} parent=19 // pred_fallthru
        _
    $region20: #{learned_positional_encoding.1} parent=5 // pred_fallthru
      _
    %p138 = scmp.le.s32.totalorder 1, %s8
    %p139 = scmp.lt.s32.totalorder %s8, 3
    %p140 = pnand %p138, %p139
    %p141 = pneg %p140
    // Predicated region
    $region25: #{learned_positional_encoding.1} parent=5 // pred_check
      _
    $region26: #{learned_positional_encoding.1} parent=5 // pred_check_branch
      %143 = sbr.rel (%p140) target = $region28
    $region27: #{learned_positional_encoding.1} parent=5 // pred_region
      %s144 = ssub.s32 %s8, 1
      %p145 = scmp.lt.s32.totalorder %s18, 1
      %s146 = scalar_select %p145, %s18, 1
      %p147 = scmp.lt.s32.totalorder %s17, 0
      %s148 = scalar_select %p147, %s17, 0
      %s149 = sadd.s32 %s148, %s146
      %s150 = smul.addr %s149, 2
      %s151 = scalar_lea.vmem %s0, %s150
      %p152 = pneg %p48
      %p153 = pneg %p45
      %p154 = scmp.lt.s32.totalorder %s17, 0
      %s155 = scalar_select %p154, %s17, 0
      %s156 = smul.addr %s155, 2
      %s157 = scalar_lea.vmem %s1, %s156
      %p158 = pneg %p74
      %p159 = pneg %p71
      %p160 = pneg %p102
      %p161 = pneg %p99
      %p162 = scmp.lt.s32.totalorder %s18, 1
      %s163 = scalar_select %p162, %s18, 1
      %p164 = scmp.lt.s32.totalorder %s17, 0
      %s165 = scalar_select %p164, %s17, 0
      %s166 = sadd.s32 %s165, %s163
      %s167 = smul.addr %s166, 2
      %s168 = scalar_lea.vmem %s2, %s167
      %p169 = scmp.lt.s32.totalorder %s18, 1
      %s170 = scalar_select %p169, %s18, 1
      %p171 = scmp.lt.s32.totalorder %s17, 0
      %s172 = scalar_select %p171, %s17, 0
      %s173 = sadd.s32 %s172, %s170
      %s174 = smul.addr %s173, 2
      %s175 = scalar_lea.vmem %s0, %s174
      %p176 = scmp.lt.s32.totalorder %s17, 0
      %s177 = scalar_select %p176, %s17, 0
      %s178 = smul.addr %s177, 2
      %s179 = scalar_lea.vmem %s1, %s178
      %p180 = scmp.lt.s32.totalorder %s18, 1
      %s181 = scalar_select %p180, %s18, 1
      %p182 = scmp.lt.s32.totalorder %s17, 0
      %s183 = scalar_select %p182, %s17, 0
      %s184 = sadd.s32 %s183, %s181
      %s185 = smul.addr %s184, 2
      %s186 = scalar_lea.vmem %s2, %s185
      %v187 = vld [vmem:[%s175] sm:$0x3]
      %v188 = vld [vmem:[%s179] sm:$0x3]
      %v189 = vadd.f32 %v187, %v188
      %190 = vst [vmem:[%s186] sm:$0x3] %v189
      %p191 = scmp.lt.s32.totalorder %s18, 1
      %s192 = scalar_select %p191, %s18, 1
      %p193 = scmp.lt.s32.totalorder %s17, 0
      %s194 = scalar_select %p193, %s17, 0
      %s195 = sadd.s32 %s194, %s192
      %s196 = smul.addr %s195, 2
      %s197 = scalar_lea.vmem %s2, %s196
      // Predicated region
      $region29: #{learned_positional_encoding.1} parent=27 // pred_check
        %p198 = pneg %p99
      $region30: #{learned_positional_encoding.1} parent=27 // pred_check_branch
        %200 = sbr.rel (%p198) target = $region32
      $region31: #{learned_positional_encoding.1} parent=27 // pred_region
        _
      $region32: #{learned_positional_encoding.1} parent=27 // pred_fallthru
        _
    $region28: #{learned_positional_encoding.1} parent=5 // pred_fallthru
      _
    %p201 = scmp.le.s32.totalorder 2, %s8
    // Predicated region
    $region33: #{learned_positional_encoding.1} parent=5 // pred_check
      %p202 = pneg %p201
    $region34: #{learned_positional_encoding.1} parent=5 // pred_check_branch
      %204 = sbr.rel (%p202) target = $region36
    $region35: #{learned_positional_encoding.1} parent=5 // pred_region
      %s205 = ssub.s32 %s8, 2
      // Predicated region
      $region37: #{learned_positional_encoding.1} parent=35 // pred_check
        %p206 = pneg %p105
      $region38: #{learned_positional_encoding.1} parent=35 // pred_check_branch
        %208 = sbr.rel (%p206) target = $region40
      $region39: #{learned_positional_encoding.1} parent=35 // pred_region
        %p209 = scmp.lt.s32.totalorder %s20, 1
        %s210 = scalar_select %p209, %s20, 1
        %p211 = scmp.lt.s32.totalorder %s19, 0
        %s212 = scalar_select %p211, %s19, 0
        %s213 = sadd.s32 %s212, %s210
        %s214 = smul.addr %s213, 2
        %s215 = scalar_lea.vmem %s2, %s214
      $region40: #{learned_positional_encoding.1} parent=35 // pred_fallthru
        _
    $region36: #{learned_positional_encoding.1} parent=5 // pred_fallthru
      _
  $region6: #{learned_positional_encoding.1} parent=0 // loop_footer
    %s12 = sadd.s32 1, %s8
  $region7: #{learned_positional_encoding.1} parent=0 // loop_footer_branch
    %7 = sbr.rel target = $region3
  $region8: #{learned_positional_encoding.1} parent=0 // loop_exit
    _

</llo_original>
